<compile_context>
chip_gen: v6e
topology: v6e:2x2x1
jax: 0.10.0
libtpu: 0.0.40
codegen_flags: <defaults>
</compile_context>

<pallas_src>
import functools

import jax
import jax.numpy as jnp
from jax import lax
from jax.experimental import pallas as pl
from jax.experimental.pallas import tpu as pltpu


def _pick_lane_chunk(d):
    # Largest convenient lane tile (multiple of 128) that divides D.
    for tl in (512, 1024, 256, 2048, 128):
        if d % tl == 0:
            return tl
    return d


def _vmem_budget_bytes():
    # Per-generation scoped-VMEM budget: v7x has 64 MiB physical per TC -> cap
    # at 48 MiB to leave compiler headroom; v5e/v6e have 128 MiB -> allow ~104.
    try:
        cap = int(getattr(pltpu.get_tpu_info(), "vmem_capacity_bytes", 128 << 20))
    except Exception:
        cap = 128 << 20
    if cap <= (64 << 20):
        return 48 << 20
    return min(cap - (24 << 20), 104 << 20)


def _pick_tn(n, d, budget_bytes):
    # Rows per grid step: fill the 8 sublanes (multiple of 8), target ~1-4 MiB
    # x blocks so per-step overhead (~0.35 us) and small DMAs don't drop us off
    # the HBM roofline, capped by the double-buffered VMEM budget.
    if n <= 8:
        return n
    row_bytes = d * 4
    gb_resident = 2 * (8 * d * 4)               # (2,D) affine block, 8-sublane padded, 2 bufs
    avail = max(budget_bytes - gb_resident - (4 << 20), 4 << 20)
    tn_vmem = max(avail // (4 * row_bytes), 1)  # x + out blocks, double-buffered
    tn_target = max((4 << 20) // row_bytes, 1)  # ~4 MiB x block
    tn = min(int(tn_vmem), int(tn_target), n)
    tn = max((tn // 8) * 8, 8)
    if tn >= n:
        # Prefer >=2 grid steps (feeds both v7x TensorCores) when the halved
        # block still moves >= 1 MiB per step.
        half = ((n // 2) // 8) * 8
        if half >= 8 and half * row_bytes >= (1 << 20):
            tn = half
    return min(tn, n)


def _layernorm_kernel(x_ref, gb_ref, o_ref, *, eps, tl, n_chunks, unroll):
    # x_ref / o_ref: (TN, D) rows of x.view(N, -1); gb_ref: (2, D) = [gamma; beta].
    # Note: when N % TN != 0 the padded tail rows compute on garbage, but their
    # writeback is clipped by Pallas -- benign, do not "fix".
    tn = x_ref.shape[0]
    n_elems = x_ref.shape[1]                    # D = C*H*W per row
    inv_n = 1.0 / n_elems
    inv_nm1 = 1.0 / max(n_elems - 1, 1)         # torch .std(): unbiased (n-1)

    # ---- Fused pass 1: per-row sum and sum-of-squares in one sweep over x ----
    def stats_body(c, carry):
        s_acc, q_acc = carry
        sl = pl.ds(pl.multiple_of(c * tl, tl), tl)
        xc = x_ref[:, sl].astype(jnp.float32)
        s_acc = s_acc + jnp.sum(xc, axis=1, keepdims=True)
        q_acc = q_acc + jnp.sum(xc * xc, axis=1, keepdims=True)
        return s_acc, q_acc

    zeros = jnp.zeros((tn, 1), jnp.float32)
    row_sum, row_ssq = lax.fori_loop(0, n_chunks, stats_body, (zeros, zeros),
                                     unroll=unroll)
    mean = row_sum * inv_n                      # (TN, 1)
    # var = (sum(x^2) - sum(x)^2/n) / (n-1); clamp at 0 to guard f32 rounding.
    # (Slight cancellation risk vs the two-pass form for data with huge mean
    # relative to its spread -- acceptable here, and it saves one full x sweep.)
    var = jnp.maximum(row_ssq - row_sum * mean, 0.0) * inv_nm1
    inv = 1.0 / (jnp.sqrt(var) + eps)           # eps added to std, per the module
    # (TN, 1): only TN exact divides; full-width work below is mul/add only.

    # ---- Pass 2: normalize + per-channel affine, chunk-by-chunk ----
    # mean/inv stay (TN,1); per-chunk sublane broadcast keeps only a few vregs
    # live across the loop even when TN is large (no spills).
    def norm_body(c, carry):
        sl = pl.ds(pl.multiple_of(c * tl, tl), tl)
        xc = x_ref[:, sl].astype(jnp.float32)
        gc = gb_ref[pl.ds(0, 1), sl]            # (1, TL) gamma (pre-expanded)
        bc = gb_ref[pl.ds(1, 1), sl]            # (1, TL) beta
        y = (xc - mean) * inv
        o_ref[:, sl] = (y * gc + bc).astype(o_ref.dtype)
        return carry

    lax.fori_loop(0, n_chunks, norm_body, 0, unroll=unroll)


def _layer_norm_impl(x, gamma, beta, eps=1e-8):
    """x: (N, C, H, W) float32. gamma, beta: (C,) float32.

    Matches the PyTorch module: per-row mean / unbiased std over x.view(N, -1),
    y = (x - mean) / (std + eps) * gamma[c] + beta[c].
    """
    N, C, H, W = x.shape
    D = C * H * W
    x2 = x.reshape(N, D)

    # One-time expansion of per-channel affine params to the flattened layout,
    # stacked into a single (2, D) block: one constant DMA stream and half the
    # padded VMEM of two separate (1, D) inputs.
    g2 = jnp.repeat(gamma.astype(jnp.float32), H * W)
    b2 = jnp.repeat(beta.astype(jnp.float32), H * W)
    gb = jnp.stack([g2, b2], axis=0)            # (2, D)

    budget = _vmem_budget_bytes()
    tn = _pick_tn(N, D, budget)
    n_steps = pl.cdiv(N, tn)

    tl = _pick_lane_chunk(D)
    n_chunks = D // tl
    unroll = n_chunks if n_chunks <= 8 else 4

    # Scoped-VMEM request: double-buffered x/out blocks + the 8-sublane-padded
    # (2, D) affine block (2 buffers) + headroom, capped per generation.
    block_bytes = tn * D * 4
    gb_bytes = 2 * 8 * D * 4
    vmem_limit = min(max(4 * block_bytes + gb_bytes + (4 << 20), 16 << 20), budget)
    # TODO(synk): for D so large that a full (tn, D) block no longer fits the
    # budget, switch x/out to memory_space=pl.ANY and pipeline the lane axis
    # in-body (manual double-buffered DMA) so x is still read from HBM once,
    # instead of a two-phase grid split that re-reads x.

    out = pl.pallas_call(
        functools.partial(_layernorm_kernel, eps=eps, tl=tl,
                          n_chunks=n_chunks, unroll=unroll),
        out_shape=jax.ShapeDtypeStruct((N, D), x.dtype),
        grid_spec=pltpu.PrefetchScalarGridSpec(
            num_scalar_prefetch=0,
            grid=(n_steps,),
            in_specs=[
                pl.BlockSpec((tn, D), lambda i: (i, 0)),
                pl.BlockSpec((2, D), lambda i: (0, 0)),
            ],
            out_specs=pl.BlockSpec((tn, D), lambda i: (i, 0)),
        ),
        compiler_params=pltpu.CompilerParams(
            dimension_semantics=("parallel",),
            vmem_limit_bytes=vmem_limit,
        ),
    )(x2, gb)
    return out.reshape(N, C, H, W)


# Jitted entry point: caches the gamma/beta expansion and the compiled kernel
# per (shape, eps), so repeated calls don't re-materialize the expansion.
layer_norm = jax.jit(_layer_norm_impl, static_argnames=("eps",))


if __name__ == "__main__":
    key = jax.random.PRNGKey(0)
    kx, kg = jax.random.split(key)

    N, C, H, W = 2, 4, 16, 16
    x = jax.random.normal(kx, (N, C, H, W), dtype=jnp.float32)

    # Deterministic parameter init mirroring torch: gamma ~ U[0,1), beta = 0
    gamma = jax.random.uniform(kg, (C,), dtype=jnp.float32)
    beta = jnp.zeros((C,), dtype=jnp.float32)

    y = layer_norm(x, gamma, beta, eps=1e-8)
    jax.block_until_ready(y)

    # Pure-JAX reference check (same semantics as the PyTorch module)
    xf = x.reshape(N, -1)
    mean = xf.mean(axis=1).reshape(N, 1, 1, 1)
    std = jnp.sqrt(((xf - xf.mean(axis=1, keepdims=True)) ** 2).sum(axis=1)
                   / (xf.shape[1] - 1)).reshape(N, 1, 1, 1)
    ref = (x - mean) / (std + 1e-8)
    ref = ref * gamma.reshape(1, C, 1, 1) + beta.reshape(1, C, 1, 1)
    assert jnp.allclose(y, ref, atol=1e-5, rtol=1e-5), "mismatch vs reference"

    print("KERNEL_OK")
</pallas_src>

<mosaic_0001>
module attributes {stable_mosaic.version = 11 : i64} {
  func.func @_layernorm_kernel(%arg0: i32, %arg1: memref<2x1024xf32, #tpu.memory_space<vmem>>, %arg2: memref<2x1024xf32, #tpu.memory_space<vmem>>, %arg3: memref<2x1024xf32, #tpu.memory_space<vmem>>) attributes {dimension_semantics = [#tpu.dimension_semantics<parallel>], iteration_bounds = array<i64: 1>, scalar_prefetch = 0 : i64, scratch_operands = 0 : i64, tpu.core_type = #tpu.core_type<tc>, window_params = [{transform_indices = @transform_0, window_bounds = array<i64: 2, 1024>}, {pipeline_mode = #tpu.pipeline_mode<synchronous>, transform_indices = @transform_1, window_bounds = array<i64: 2, 1024>}, {transform_indices = @transform_2, window_bounds = array<i64: 2, 1024>}]} {
    %cst = arith.constant 0.000000e+00 : f32
    %0 = vector.broadcast %cst : f32 to vector<2x1xf32>
    %c0_i32 = arith.constant 0 : i32
    %c512_i32 = arith.constant 512 : i32
    %1 = arith.muli %c0_i32, %c512_i32 : i32
    %2 = tpu.assume_multiple %1, 512 : i32
    %c0 = arith.constant 0 : index
    %3 = arith.index_cast %2 : i32 to index
    %4 = vector.load %arg1[%c0, %3] : memref<2x1024xf32, #tpu.memory_space<vmem>>, vector<2x512xf32>
    %cst_0 = arith.constant dense<0.000000e+00> : vector<2xf32>
    %5 = vector.multi_reduction <add>, %4, %cst_0 [1] : vector<2x512xf32> to vector<2xf32>
    %6 = vector.shape_cast %5 : vector<2xf32> to vector<2x1xf32>
    %7 = arith.addf %0, %6 : vector<2x1xf32>
    %8 = arith.mulf %4, %4 : vector<2x512xf32>
    %cst_1 = arith.constant dense<0.000000e+00> : vector<2xf32>
    %9 = vector.multi_reduction <add>, %8, %cst_1 [1] : vector<2x512xf32> to vector<2xf32>
    %10 = vector.shape_cast %9 : vector<2xf32> to vector<2x1xf32>
    %11 = arith.addf %0, %10 : vector<2x1xf32>
    %c1_i32 = arith.constant 1 : i32
    %c512_i32_2 = arith.constant 512 : i32
    %12 = arith.muli %c1_i32, %c512_i32_2 : i32
    %13 = tpu.assume_multiple %12, 512 : i32
    %c0_3 = arith.constant 0 : index
    %14 = arith.index_cast %13 : i32 to index
    %15 = vector.load %arg1[%c0_3, %14] : memref<2x1024xf32, #tpu.memory_space<vmem>>, vector<2x512xf32>
    %cst_4 = arith.constant dense<0.000000e+00> : vector<2xf32>
    %16 = vector.multi_reduction <add>, %15, %cst_4 [1] : vector<2x512xf32> to vector<2xf32>
    %17 = vector.shape_cast %16 : vector<2xf32> to vector<2x1xf32>
    %18 = arith.addf %7, %17 : vector<2x1xf32>
    %19 = arith.mulf %15, %15 : vector<2x512xf32>
    %cst_5 = arith.constant dense<0.000000e+00> : vector<2xf32>
    %20 = vector.multi_reduction <add>, %19, %cst_5 [1] : vector<2x512xf32> to vector<2xf32>
    %21 = vector.shape_cast %20 : vector<2xf32> to vector<2x1xf32>
    %22 = arith.addf %11, %21 : vector<2x1xf32>
    %c2_i32 = arith.constant 2 : i32
    %cst_6 = arith.constant 9.765625E-4 : f32
    %23 = vector.broadcast %cst_6 : f32 to vector<2x1xf32>
    %24 = arith.mulf %18, %23 : vector<2x1xf32>
    %25 = arith.mulf %18, %24 : vector<2x1xf32>
    %26 = arith.subf %22, %25 : vector<2x1xf32>
    %cst_7 = arith.constant 0.000000e+00 : f32
    %27 = vector.broadcast %cst_7 : f32 to vector<2x1xf32>
    %28 = arith.maximumf %26, %27 : vector<2x1xf32>
    %cst_8 = arith.constant 9.77517105E-4 : f32
    %29 = vector.broadcast %cst_8 : f32 to vector<2x1xf32>
    %30 = arith.mulf %28, %29 : vector<2x1xf32>
    %31 = math.sqrt %30 : vector<2x1xf32>
    %cst_9 = arith.constant 9.99999993E-9 : f32
    %32 = vector.broadcast %cst_9 : f32 to vector<2x1xf32>
    %33 = arith.addf %31, %32 : vector<2x1xf32>
    %cst_10 = arith.constant 1.000000e+00 : f32
    %34 = vector.broadcast %cst_10 : f32 to vector<2x1xf32>
    %35 = arith.divf %34, %33 : vector<2x1xf32>
    %c0_i32_11 = arith.constant 0 : i32
    %c512_i32_12 = arith.constant 512 : i32
    %36 = arith.muli %c0_i32_11, %c512_i32_12 : i32
    %37 = tpu.assume_multiple %36, 512 : i32
    %c0_13 = arith.constant 0 : index
    %38 = arith.index_cast %37 : i32 to index
    %39 = vector.load %arg1[%c0_13, %38] : memref<2x1024xf32, #tpu.memory_space<vmem>>, vector<2x512xf32>
    %c0_14 = arith.constant 0 : index
    %40 = arith.index_cast %37 : i32 to index
    %41 = vector.load %arg2[%c0_14, %40] : memref<2x1024xf32, #tpu.memory_space<vmem>>, vector<1x512xf32>
    %c1 = arith.constant 1 : index
    %42 = arith.index_cast %37 : i32 to index
    %43 = vector.load %arg2[%c1, %42] : memref<2x1024xf32, #tpu.memory_space<vmem>>, vector<1x512xf32>
    %44 = vector.broadcast %24 : vector<2x1xf32> to vector<2x512xf32>
    %45 = arith.subf %39, %44 : vector<2x512xf32>
    %46 = vector.broadcast %35 : vector<2x1xf32> to vector<2x512xf32>
    %47 = arith.mulf %45, %46 : vector<2x512xf32>
    %48 = vector.broadcast %41 : vector<1x512xf32> to vector<2x512xf32>
    %49 = arith.mulf %47, %48 : vector<2x512xf32>
    %50 = vector.broadcast %43 : vector<1x512xf32> to vector<2x512xf32>
    %51 = arith.addf %49, %50 : vector<2x512xf32>
    %c0_15 = arith.constant 0 : index
    %52 = arith.index_cast %37 : i32 to index
    %53 = vector.load %arg3[%c0_15, %52] : memref<2x1024xf32, #tpu.memory_space<vmem>>, vector<2x512xf32>
    tpu.vector_store %arg3[%c0_15, %52], %51 {strides = array<i32>} : memref<2x1024xf32, #tpu.memory_space<vmem>>, vector<2x512xf32>,
    %c1_i32_16 = arith.constant 1 : i32
    %c512_i32_17 = arith.constant 512 : i32
    %54 = arith.muli %c1_i32_16, %c512_i32_17 : i32
    %55 = tpu.assume_multiple %54, 512 : i32
    %c0_18 = arith.constant 0 : index
    %56 = arith.index_cast %55 : i32 to index
    %57 = vector.load %arg1[%c0_18, %56] : memref<2x1024xf32, #tpu.memory_space<vmem>>, vector<2x512xf32>
    %c0_19 = arith.constant 0 : index
    %58 = arith.index_cast %55 : i32 to index
    %59 = vector.load %arg2[%c0_19, %58] : memref<2x1024xf32, #tpu.memory_space<vmem>>, vector<1x512xf32>
    %c1_20 = arith.constant 1 : index
    %60 = arith.index_cast %55 : i32 to index
    %61 = vector.load %arg2[%c1_20, %60] : memref<2x1024xf32, #tpu.memory_space<vmem>>, vector<1x512xf32>
    %62 = vector.broadcast %24 : vector<2x1xf32> to vector<2x512xf32>
    %63 = arith.subf %57, %62 : vector<2x512xf32>
    %64 = vector.broadcast %35 : vector<2x1xf32> to vector<2x512xf32>
    %65 = arith.mulf %63, %64 : vector<2x512xf32>
    %66 = vector.broadcast %59 : vector<1x512xf32> to vector<2x512xf32>
    %67 = arith.mulf %65, %66 : vector<2x512xf32>
    %68 = vector.broadcast %61 : vector<1x512xf32> to vector<2x512xf32>
    %69 = arith.addf %67, %68 : vector<2x512xf32>
    %c0_21 = arith.constant 0 : index
    %70 = arith.index_cast %55 : i32 to index
    %71 = vector.load %arg3[%c0_21, %70] : memref<2x1024xf32, #tpu.memory_space<vmem>>, vector<2x512xf32>
    tpu.vector_store %arg3[%c0_21, %70], %69 {strides = array<i32>} : memref<2x1024xf32, #tpu.memory_space<vmem>>, vector<2x512xf32>,
    %c2_i32_22 = arith.constant 2 : i32
    return
  }
  func.func @transform_0(%arg0: i32) -> (i32, i32) {
    %c0_i32 = arith.constant 0 : i32
    %c0_i32_0 = arith.constant 0 : i32
    return %arg0, %c0_i32 : i32, i32
  }
  func.func @transform_1(%arg0: i32) -> (i32, i32) {
    %c0_i32 = arith.constant 0 : i32
    %c0_i32_0 = arith.constant 0 : i32
    %c0_i32_1 = arith.constant 0 : i32
    return %c0_i32, %c0_i32_0 : i32, i32
  }
  func.func @transform_2(%arg0: i32) -> (i32, i32) {
    %c0_i32 = arith.constant 0 : i32
    %c0_i32_0 = arith.constant 0 : i32
    return %arg0, %c0_i32 : i32, i32
  }
}

</mosaic_0001>

<llo_original>
// kernel: _layer_norm_impl.1
$region0: #{_layer_norm_impl.1}
  #allocation0 [shape = 'u32[]', space=smem, size = 0x4, offset = 0x4, fixed_abs, tag = 'smem constant byte address 0x4 - core index']
  #allocation1 [shape = 'u32[144,128]{1,0:T(1,128)}', space=vmem, size = 0x12000, scoped, tag = 'internal scratch']
  %s0 = inlined_call_operand.vmem [shape: f32[2,1024], index: 0, kind: input, shape index: {}]
  %s1 = inlined_call_operand.vmem [shape: f32[2,1024], index: 1, kind: input, shape index: {}]
  %s2 = inlined_call_operand.vmem [shape: f32[2,1024], index: 2, kind: output, shape index: {}]
  %s3 = sld [smem:[#allocation0]]
  $region18: #{_layer_norm_impl.1} parent=0
    _
  %s5 = ssub.s32 1, %s3
  %s6 = scalar_select 0, %s5, %s3
  // Predicated region
  $region2: #{_layer_norm_impl.1} parent=0 // pred_check
    _
  $region3: #{_layer_norm_impl.1} parent=0 // pred_check_branch
    %8 = sbr.rel (0) target = $region5
  $region4: #{_layer_norm_impl.1} parent=0 // pred_region
    _
  $region5: #{_layer_norm_impl.1} parent=0 // pred_fallthru
    _
  // Predicated region
  $region6: #{_layer_norm_impl.1} parent=0 // pred_check
    _
  $region7: #{_layer_norm_impl.1} parent=0 // pred_check_branch
    %10 = sbr.rel (0) target = $region9
  $region8: #{_layer_norm_impl.1} parent=0 // pred_region
    _
  $region9: #{_layer_norm_impl.1} parent=0 // pred_fallthru
    _
  %v11 = vld [vmem:[%s0] sm:$0xff]
  %v13 = vcombine.high %v11, %v11
  %v15 = vunpack.c.l.s4 1983009808
  %v16 = vunpack.c.0.s8 %v15
  %v17 = vlaneseq
  %v18 = vshrl.u32 %v17, 7
  %v19 = vsub.s32 %v16, %v18
  %v20 = vrot.slane %v11, %v19
  %v22 = vunpack.c.l.s4 1983009808
  %v23 = vunpack.c.0.s8 %v22
  %v24 = vlaneseq
  %v25 = vshrl.u32 %v24, 7
  %v26 = vsub.s32 %v23, %v25
  %v27 = vrot.slane %v13, %v26
  %v28 = vcombine.high %v20, %v20
  %v29 = vcombine.high %v27, %v27
  %vm34 = vcmask 1041408
  %v35 = vsel %vm34, %v20, 0.0
  %v36 = vsel %vm34, %v28, 0.0
  %v37 = vadd.f32 %v35, %v36
  %v38 = vsel %vm34, %v27, 0.0
  %v39 = vadd.f32 %v37, %v38
  %v40 = vsel %vm34, %v29, 0.0
  %v41 = vadd.f32 %v39, %v40
  %42 = vadd.xlane.f32.xlu0 %v41
  %v43 = vpop.xlane.xlu0 %42
  %v44 = vadd.f32 %v43, 0.0
  %v45 = vmul.f32 %v11, %v11
  %v47 = vcombine.high %v45, %v45
  %v49 = vunpack.c.l.s4 1983009808
  %v50 = vunpack.c.0.s8 %v49
  %v51 = vlaneseq
  %v52 = vshrl.u32 %v51, 7
  %v53 = vsub.s32 %v50, %v52
  %v54 = vrot.slane %v45, %v53
  %v56 = vunpack.c.l.s4 1983009808
  %v57 = vunpack.c.0.s8 %v56
  %v58 = vlaneseq
  %v59 = vshrl.u32 %v58, 7
  %v60 = vsub.s32 %v57, %v59
  %v61 = vrot.slane %v47, %v60
  %v62 = vcombine.high %v54, %v54
  %v63 = vcombine.high %v61, %v61
  %v68 = vsel %vm34, %v54, 0.0
  %v69 = vsel %vm34, %v62, 0.0
  %v70 = vadd.f32 %v68, %v69
  %v71 = vsel %vm34, %v61, 0.0
  %v72 = vadd.f32 %v70, %v71
  %v73 = vsel %vm34, %v63, 0.0
  %v74 = vadd.f32 %v72, %v73
  %75 = vadd.xlane.f32.xlu0 %v74
  %v76 = vpop.xlane.xlu0 %75
  %v77 = vadd.f32 %v76, 0.0
  %s78 = scalar_lea.vmem %s0, 8
  %v79 = vld [vmem:[%s78] sm:$0xff]
  %v81 = vcombine.high %v79, %v79
  %v83 = vunpack.c.l.s4 1983009808
  %v84 = vunpack.c.0.s8 %v83
  %v85 = vlaneseq
  %v86 = vshrl.u32 %v85, 7
  %v87 = vsub.s32 %v84, %v86
  %v88 = vrot.slane %v79, %v87
  %v90 = vunpack.c.l.s4 1983009808
  %v91 = vunpack.c.0.s8 %v90
  %v92 = vlaneseq
  %v93 = vshrl.u32 %v92, 7
  %v94 = vsub.s32 %v91, %v93
  %v95 = vrot.slane %v81, %v94
  %v96 = vcombine.high %v88, %v88
  %v97 = vcombine.high %v95, %v95
  %v102 = vsel %vm34, %v88, 0.0
  %v103 = vsel %vm34, %v96, 0.0
  %v104 = vadd.f32 %v102, %v103
  %v105 = vsel %vm34, %v95, 0.0
  %v106 = vadd.f32 %v104, %v105
  %v107 = vsel %vm34, %v97, 0.0
  %v108 = vadd.f32 %v106, %v107
  %109 = vadd.xlane.f32.xlu0 %v108
  %v110 = vpop.xlane.xlu0 %109
  %v111 = vadd.f32 %v44, %v110
  %v112 = vmul.f32 %v79, %v79
  %v114 = vcombine.high %v112, %v112
  %v116 = vunpack.c.l.s4 1983009808
  %v117 = vunpack.c.0.s8 %v116
  %v118 = vlaneseq
  %v119 = vshrl.u32 %v118, 7
  %v120 = vsub.s32 %v117, %v119
  %v121 = vrot.slane %v112, %v120
  %v123 = vunpack.c.l.s4 1983009808
  %v124 = vunpack.c.0.s8 %v123
  %v125 = vlaneseq
  %v126 = vshrl.u32 %v125, 7
  %v127 = vsub.s32 %v124, %v126
  %v128 = vrot.slane %v114, %v127
  %v129 = vcombine.high %v121, %v121
  %v130 = vcombine.high %v128, %v128
  %v135 = vsel %vm34, %v121, 0.0
  %v136 = vsel %vm34, %v129, 0.0
  %v137 = vadd.f32 %v135, %v136
  %v138 = vsel %vm34, %v128, 0.0
  %v139 = vadd.f32 %v137, %v138
  %v140 = vsel %vm34, %v130, 0.0
  %v141 = vadd.f32 %v139, %v140
  %142 = vadd.xlane.f32.xlu0 %v141
  %v143 = vpop.xlane.xlu0 %142
  %v144 = vadd.f32 %v77, %v143
  %v145 = vmul.f32 %v111, 0.0009765625
  %v146 = vmul.f32 %v111, %v145
  %v147 = vsub.f32 %v144, %v146
  %v148 = vmax.f32 %v147, 0.0
  %v149 = vmul.f32 %v148, 0.0009775171
  %v150 = vrsqrt.pop %v149
  %v151 = vmul.f32 %v149, %v150
  %vm152 = vcmp.eq.f32.partialorder %v149, inf
  %v153 = vsel %vm152, %v149, %v151
  %vm154 = vcmp.eq.f32.partialorder %v149, 0.0
  %v155 = vand.u32 %v149, 2147483648
  %v156 = vsel %vm154, %v155, %v153
  %v157 = vadd.f32 %v156, 1e-08
  %v158 = vrcp.pop %v157
  %v159 = vmul.f32 1.0, %v158
  %v160 = vld [vmem:[%s1] ss:$2 sm:$0xf]
  %s161 = scalar_lea.vmem %s1, 1
  %v162 = vld [vmem:[%s161] ss:$2 sm:$0xf]
  %v165 = vunpack.c.l.s4 269488144
  %v166 = vunpack.c.0.s8 %v165
  %v167 = vlaneseq
  %v168 = vshrl.u32 %v167, 7
  %v169 = vsub.s32 %v166, %v168
  %v170 = vrot.slane %v145, %v169
  %v172 = vsub.f32 %v11, %v170
  %v175 = vunpack.c.l.s4 269488144
  %v176 = vunpack.c.0.s8 %v175
  %v177 = vlaneseq
  %v178 = vshrl.u32 %v177, 7
  %v179 = vsub.s32 %v176, %v178
  %v180 = vrot.slane %v159, %v179
  %v182 = vmul.f32 %v172, %v180
  %v184 = vlaneseq
  %v185 = vshrl.u32 %v184, 7
  %v186 = vsub.s32 0, %v185
  %v187 = vrot.slane %v160, %v186
  %v188 = vlaneseq
  %v189 = vshrl.u32 %v188, 7
  %v190 = vsub.s32 1, %v189
  %v191 = vrot.slane %v160, %v190
  %v192 = vlaneseq
  %v193 = vshrl.u32 %v192, 7
  %v194 = vsub.s32 2, %v193
  %v195 = vrot.slane %v160, %v194
  %v196 = vlaneseq
  %v197 = vshrl.u32 %v196, 7
  %v198 = vsub.s32 3, %v197
  %v199 = vrot.slane %v160, %v198
  %v200 = vcombine.low %v187, %v191
  %v201 = vcombine.low %v195, %v199
  %v203 = vunpack.c.l.s4 1983009808
  %v204 = vunpack.c.0.s8 %v203
  %v205 = vlaneseq
  %v206 = vshrl.u32 %v205, 7
  %v207 = vsub.s32 %v204, %v206
  %v208 = vrot.slane %v200, %v207
  %v210 = vunpack.c.l.s4 1983009808
  %v211 = vunpack.c.0.s8 %v210
  %v212 = vlaneseq
  %v213 = vshrl.u32 %v212, 7
  %v214 = vsub.s32 %v211, %v213
  %v215 = vrot.slane %v201, %v214
  %v216 = vcombine.low %v208, %v215
  %v218 = vmul.f32 %v182, %v216
  %v220 = vlaneseq
  %v221 = vshrl.u32 %v220, 7
  %v222 = vsub.s32 0, %v221
  %v223 = vrot.slane %v162, %v222
  %v224 = vlaneseq
  %v225 = vshrl.u32 %v224, 7
  %v226 = vsub.s32 1, %v225
  %v227 = vrot.slane %v162, %v226
  %v228 = vlaneseq
  %v229 = vshrl.u32 %v228, 7
  %v230 = vsub.s32 2, %v229
  %v231 = vrot.slane %v162, %v230
  %v232 = vlaneseq
  %v233 = vshrl.u32 %v232, 7
  %v234 = vsub.s32 3, %v233
  %v235 = vrot.slane %v162, %v234
  %v236 = vcombine.low %v223, %v227
  %v237 = vcombine.low %v231, %v235
  %v239 = vunpack.c.l.s4 1983009808
  %v240 = vunpack.c.0.s8 %v239
  %v241 = vlaneseq
  %v242 = vshrl.u32 %v241, 7
  %v243 = vsub.s32 %v240, %v242
  %v244 = vrot.slane %v236, %v243
  %v246 = vunpack.c.l.s4 1983009808
  %v247 = vunpack.c.0.s8 %v246
  %v248 = vlaneseq
  %v249 = vshrl.u32 %v248, 7
  %v250 = vsub.s32 %v247, %v249
  %v251 = vrot.slane %v237, %v250
  %v252 = vcombine.low %v244, %v251
  %v254 = vadd.f32 %v218, %v252
  %255 = vst [vmem:[%s2] sm:$0xff] %v254
  %v256 = vld [vmem:[%s78] sm:$0xff]
  %s257 = scalar_lea.vmem %s1, 8
  %v258 = vld [vmem:[%s257] ss:$2 sm:$0xf]
  %s259 = scalar_lea.vmem %s257, 1
  %v260 = vld [vmem:[%s259] ss:$2 sm:$0xf]
  %v261 = vsub.f32 %v256, %v170
  %v262 = vmul.f32 %v261, %v180
  %v264 = vlaneseq
  %v265 = vshrl.u32 %v264, 7
  %v266 = vsub.s32 0, %v265
  %v267 = vrot.slane %v258, %v266
  %v268 = vlaneseq
  %v269 = vshrl.u32 %v268, 7
  %v270 = vsub.s32 1, %v269
  %v271 = vrot.slane %v258, %v270
  %v272 = vlaneseq
  %v273 = vshrl.u32 %v272, 7
  %v274 = vsub.s32 2, %v273
  %v275 = vrot.slane %v258, %v274
  %v276 = vlaneseq
  %v277 = vshrl.u32 %v276, 7
  %v278 = vsub.s32 3, %v277
  %v279 = vrot.slane %v258, %v278
  %v280 = vcombine.low %v267, %v271
  %v281 = vcombine.low %v275, %v279
  %v283 = vunpack.c.l.s4 1983009808
  %v284 = vunpack.c.0.s8 %v283
  %v285 = vlaneseq
  %v286 = vshrl.u32 %v285, 7
  %v287 = vsub.s32 %v284, %v286
  %v288 = vrot.slane %v280, %v287
  %v290 = vunpack.c.l.s4 1983009808
  %v291 = vunpack.c.0.s8 %v290
  %v292 = vlaneseq
  %v293 = vshrl.u32 %v292, 7
  %v294 = vsub.s32 %v291, %v293
  %v295 = vrot.slane %v281, %v294
  %v296 = vcombine.low %v288, %v295
  %v298 = vmul.f32 %v262, %v296
  %v300 = vlaneseq
  %v301 = vshrl.u32 %v300, 7
  %v302 = vsub.s32 0, %v301
  %v303 = vrot.slane %v260, %v302
  %v304 = vlaneseq
  %v305 = vshrl.u32 %v304, 7
  %v306 = vsub.s32 1, %v305
  %v307 = vrot.slane %v260, %v306
  %v308 = vlaneseq
  %v309 = vshrl.u32 %v308, 7
  %v310 = vsub.s32 2, %v309
  %v311 = vrot.slane %v260, %v310
  %v312 = vlaneseq
  %v313 = vshrl.u32 %v312, 7
  %v314 = vsub.s32 3, %v313
  %v315 = vrot.slane %v260, %v314
  %v316 = vcombine.low %v303, %v307
  %v317 = vcombine.low %v311, %v315
  %v319 = vunpack.c.l.s4 1983009808
  %v320 = vunpack.c.0.s8 %v319
  %v321 = vlaneseq
  %v322 = vshrl.u32 %v321, 7
  %v323 = vsub.s32 %v320, %v322
  %v324 = vrot.slane %v316, %v323
  %v326 = vunpack.c.l.s4 1983009808
  %v327 = vunpack.c.0.s8 %v326
  %v328 = vlaneseq
  %v329 = vshrl.u32 %v328, 7
  %v330 = vsub.s32 %v327, %v329
  %v331 = vrot.slane %v317, %v330
  %v332 = vcombine.low %v324, %v331
  %v334 = vadd.f32 %v298, %v332
  %s335 = scalar_lea.vmem %s2, 8
  %336 = vst [vmem:[%s335] sm:$0xff] %v334
  // Predicated region
  $region10: #{_layer_norm_impl.1} parent=0 // pred_check
    _
  $region11: #{_layer_norm_impl.1} parent=0 // pred_check_branch
    %338 = sbr.rel (0) target = $region13
  $region12: #{_layer_norm_impl.1} parent=0 // pred_region
    _
  $region13: #{_layer_norm_impl.1} parent=0 // pred_fallthru
    _
  // Predicated region
  $region14: #{_layer_norm_impl.1} parent=0 // pred_check
    _
  $region15: #{_layer_norm_impl.1} parent=0 // pred_check_branch
    %340 = sbr.rel (0) target = $region17
  $region16: #{_layer_norm_impl.1} parent=0 // pred_region
    _
  $region17: #{_layer_norm_impl.1} parent=0 // pred_fallthru
    _

</llo_original>
